<compile_context>
chip_gen: v7x
topology: tpu7x:2x2x1
jax: 0.10.0
libtpu: 0.0.40
codegen_flags: <defaults>
</compile_context>

<pallas_src>
import numpy as np
import jax
import jax.numpy as jnp
from jax import lax
from jax.experimental import pallas as pl
from jax.experimental.pallas import tpu as pltpu

# ----- configuration (mirrors `opt` of the PyTorch module) -------------------
NC = 4                    # opt.nc
NZ = 32                   # opt.nz
IN_FEATURES = NC * 30     # flattened feature size used by x.view(-1, nc*30)
BATCH = 8                 # small example batch


# ----- Pallas kernel: flatten + Linear as a single MXU matmul -----------------
def _linear_kernel(x_ref, w_ref, b_ref, o_ref):
    # x_ref : (M, K)   w_ref : (NZ, K)   b_ref : (1, NZ)   o_ref : (M, NZ)
    y = lax.dot_general(
        x_ref[...], w_ref[...],
        dimension_numbers=(((1,), (1,)), ((), ())),   # contract K of both, no transpose
        preferred_element_type=jnp.float32,
    )
    o_ref[...] = (y + b_ref[...]).astype(o_ref.dtype)


# ----- one-time parameter preparation (outside the jit'd call path) -----------
def prepare_params(weight, bias):
    """weight: (NZ, NC*30) PyTorch layout (kept as-is); bias: (NZ,) -> (1, NZ)."""
    w = jnp.asarray(weight, jnp.float32)
    b2 = jnp.asarray(bias, jnp.float32).reshape(1, NZ)
    return w, b2


# ----- forward wrapper ---------------------------------------------------------
@jax.jit
def encoder1_forward(x, weight, bias2d):
    """x: any shape flattenable to (-1, NC*30); weight: (NZ, NC*30); bias2d: (1, NZ)."""
    x2 = x.reshape(-1, IN_FEATURES)          # == x.view(-1, nc*30)
    m = x2.shape[0]

    vmem = pl.BlockSpec(memory_space=pltpu.MemorySpace.VMEM)
    out = pl.pallas_call(
        _linear_kernel,
        out_shape=jax.ShapeDtypeStruct((m, NZ), jnp.float32),
        in_specs=[vmem, vmem, vmem],          # whole arrays resident in VMEM, no grid
        out_specs=vmem,
    )(x2, weight, bias2d)
    return out


# ----- pure-JAX reference (correctness check only) -----------------------------
def _ref_forward(x, weight, bias2d):
    x2 = x.reshape(-1, IN_FEATURES)
    return jnp.dot(x2, weight.T, precision=lax.Precision.HIGHEST) + bias2d


# ----- main --------------------------------------------------------------------
if __name__ == "__main__":
    key = jax.random.PRNGKey(0)
    k1, k2, k3 = jax.random.split(key, 3)

    x = jax.random.normal(k1, (BATCH, NC, 30), jnp.float32)            # (8, 4, 30)
    weight = jax.random.normal(k2, (NZ, IN_FEATURES), jnp.float32) * 0.05
    bias = jax.random.normal(k3, (NZ,), jnp.float32) * 0.05

    w, b2 = prepare_params(weight, bias)      # once, outside the jit'd hot path

    out = encoder1_forward(x, w, b2)
    out = jax.block_until_ready(out)

    ref = _ref_forward(x, w, b2)
    np.testing.assert_allclose(np.asarray(out), np.asarray(ref),
                               rtol=1e-3, atol=1e-3)

    print("KERNEL_OK")
</pallas_src>

<mosaic_0001>
module attributes {stable_mosaic.version = 11 : i64} {
  func.func @_linear_kernel(%arg0: memref<8x120xf32, #tpu.memory_space<vmem>>, %arg1: memref<32x120xf32, #tpu.memory_space<vmem>>, %arg2: memref<1x32xf32, #tpu.memory_space<vmem>>, %arg3: memref<8x32xf32, #tpu.memory_space<vmem>>) attributes {dimension_semantics = [], scalar_prefetch = 0 : i64, scratch_operands = 0 : i64, tpu.core_type = #tpu.core_type<tc>} {
    %c0 = arith.constant 0 : index
    %c0_0 = arith.constant 0 : index
    %0 = vector.load %arg0[%c0, %c0_0] : memref<8x120xf32, #tpu.memory_space<vmem>>, vector<8x120xf32>
    %c0_1 = arith.constant 0 : index
    %c0_2 = arith.constant 0 : index
    %1 = vector.load %arg1[%c0_1, %c0_2] : memref<32x120xf32, #tpu.memory_space<vmem>>, vector<32x120xf32>
    %cst = arith.constant dense<0.000000e+00> : vector<8x32xf32>
    %2 = tpu.matmul %0, %1, %cst {dimension_numbers = #tpu.dot_dimension_numbers<[1], [1], [0], [0], [0, 0, 1, 0], [], []>} : vector<8x120xf32>, vector<32x120xf32>, vector<8x32xf32> -> vector<8x32xf32>
    %c0_3 = arith.constant 0 : index
    %c0_4 = arith.constant 0 : index
    %3 = vector.load %arg2[%c0_3, %c0_4] : memref<1x32xf32, #tpu.memory_space<vmem>>, vector<1x32xf32>
    %4 = vector.broadcast %3 : vector<1x32xf32> to vector<8x32xf32>
    %5 = arith.addf %2, %4 : vector<8x32xf32>
    %c0_5 = arith.constant 0 : index
    %c0_6 = arith.constant 0 : index
    %6 = vector.load %arg3[%c0_5, %c0_6] : memref<8x32xf32, #tpu.memory_space<vmem>>, vector<8x32xf32>
    tpu.vector_store %arg3[%c0_5, %c0_6], %5 {strides = array<i32>} : memref<8x32xf32, #tpu.memory_space<vmem>>, vector<8x32xf32>,
    return
  }
}

</mosaic_0001>

<llo_original>
// kernel: encoder1_forward.1
$region0: #{encoder1_forward.1}
  #allocation0 [shape = 'u32[]', space=smem, size = 0x4, offset = 0x4, fixed_abs, tag = 'smem constant byte address 0x4 - core index']
  #allocation1 [shape = 'u32[144,128]{1,0:T(1,128)}', space=vmem, size = 0x12000, scoped, tag = 'internal scratch']
  %s0 = inlined_call_operand.vmem [shape: f32[8,120], index: 0, kind: input, shape index: {}]
  %s1 = inlined_call_operand.vmem [shape: f32[32,120], index: 1, kind: input, shape index: {}]
  %s2 = inlined_call_operand.vmem [shape: f32[1,32], index: 2, kind: input, shape index: {}]
  %s3 = inlined_call_operand.hbm [shape: f32[8,32], index: 3, kind: output, shape index: {}]
  %s4 = sld [smem:[#allocation0]]
  $region22: #{encoder1_forward.1} parent=0
    _
  %s6 = ssub.s32 1, %s4
  %s7 = scalar_select 0, %s6, %s4
  $region1: #{encoder1_forward.1} parent=0
    #allocation2 [shape = 'u8[4096]{0}', space=vmem, size = 0x1000, scoped, tag = 'output window, operand 0, single buffered']
    #allocation3 [shape = 's32[1]{0}', space=sflag, size = 0x4, scoped, tag = 'scoped memory for encoder1_forward.1']
    %8 = vsyncpa [#allocation3], 0
    // Predicated region
    $region2: #{encoder1_forward.1} parent=1 // pred_check
      _
    $region3: #{encoder1_forward.1} parent=1 // pred_check_branch
      %10 = sbr.rel (0) target = $region5
    $region4: #{encoder1_forward.1} parent=1 // pred_region
      _
    $region5: #{encoder1_forward.1} parent=1 // pred_fallthru
      _
    // Predicated region
    $region6: #{encoder1_forward.1} parent=1 // pred_check
      _
    $region7: #{encoder1_forward.1} parent=1 // pred_check_branch
      %12 = sbr.rel (0) target = $region9
    $region8: #{encoder1_forward.1} parent=1 // pred_region
      _
    $region9: #{encoder1_forward.1} parent=1 // pred_fallthru
      _
    // Predicated region
    $region10: #{encoder1_forward.1} parent=1 // pred_check
      _
    $region11: #{encoder1_forward.1} parent=1 // pred_check_branch
      %14 = sbr.rel (0) target = $region13
    $region12: #{encoder1_forward.1} parent=1 // pred_region
      _
    $region13: #{encoder1_forward.1} parent=1 // pred_fallthru
      _
    %v15 = vld [vmem:[%s0] sm:$0xff]
    %v16 = vld [vmem:[%s1] sm:$0xff]
    %v17 = vld [vmem:[%s1 + $0x8] sm:$0xff]
    %v18 = vld [vmem:[%s1 + $0x10] sm:$0xff]
    %v19 = vld [vmem:[%s1 + $0x18] sm:$0xff]
    %v20 = vld [vmem:[%s2] sm:$0x1]
    %v22 = vlaneseq
    %v23 = vshrl.u32 %v22, 7
    %v24 = vsub.s32 0, %v23
    %v25 = vrot.slane %v20, %v24
    %vm27 = vcmask 982016
    %v29 = vsel %vm27, %v15, 0
    %v32 = vsel %vm27, %v16, 0
    %v35 = vsel %vm27, %v17, 0
    %v38 = vsel %vm27, %v18, 0
    %v41 = vsel %vm27, %v19, 0
    %43 = vmatprep.subr.mxu0 0.0
    %44 = vmatpush1.xpose.msra.mxu0 %v32
    %45 = vmatprep.subr.mxu0 0.0
    %46 = vmatpush1.xpose.msra.mxu0 %v35
    %47 = vmatprep.subr.mxu0 0.0
    %48 = vmatpush1.xpose.msra.mxu0 %v38
    %49 = vmatprep.subr.mxu0 0.0
    %50 = vmatpush1.xpose.msra.mxu0 %v41
    %51 = vmatprep.subr.mxu0 0.0
    %52 = vmatpush1.xpose.msra.mxu0 0.0
    %53 = vmatprep.subr.mxu0 0.0
    %54 = vmatpush1.xpose.msra.mxu0 0.0
    %55 = vmatprep.subr.mxu0 0.0
    %56 = vmatpush1.xpose.msra.mxu0 0.0
    %57 = vmatprep.subr.mxu0 0.0
    %58 = vmatpush1.xpose.msra.mxu0 0.0
    %59 = vmatprep.subr.mxu0 0.0
    %60 = vmatpush1.xpose.msra.mxu0 0.0
    %61 = vmatprep.subr.mxu0 0.0
    %62 = vmatpush1.xpose.msra.mxu0 0.0
    %63 = vmatprep.subr.mxu0 0.0
    %64 = vmatpush1.xpose.msra.mxu0 0.0
    %65 = vmatprep.subr.mxu0 0.0
    %66 = vmatpush1.xpose.msra.mxu0 0.0
    %67 = vmatprep.subr.mxu0 0.0
    %68 = vmatpush1.xpose.msra.mxu0 0.0
    %69 = vmatprep.subr.mxu0 0.0
    %70 = vmatpush1.xpose.msra.mxu0 0.0
    %71 = vmatprep.subr.mxu0 0.0
    %72 = vmatpush1.xpose.msra.mxu0 0.0
    %73 = vmatprep.subr.mxu0 0.0
    %74 = vmatpush1.xpose.msra.mxu0 0.0
    %75 = vmatprep.subr.mxu0 0.0
    %76 = vmatpush1.xpose.msra.mxu0 0.0
    %77 = vmatprep.subr.mxu0 0.0
    %78 = vmatpush1.xpose.msra.mxu0 0.0
    %79 = vmatprep.subr.mxu0 0.0
    %80 = vmatpush1.xpose.msra.mxu0 0.0
    %81 = vmatprep.subr.mxu0 0.0
    %82 = vmatpush1.xpose.msra.mxu0 0.0
    %83 = vmatprep.subr.mxu0 0.0
    %84 = vmatpush1.xpose.msra.mxu0 0.0
    %85 = vmatprep.subr.mxu0 0.0
    %86 = vmatpush1.xpose.msra.mxu0 0.0
    %87 = vmatprep.subr.mxu0 0.0
    %88 = vmatpush1.xpose.msra.mxu0 0.0
    %89 = vmatprep.subr.mxu0 0.0
    %90 = vmatpush1.xpose.msra.mxu0 0.0
    %91 = vmatprep.subr.mxu0 0.0
    %92 = vmatpush1.xpose.msra.mxu0 0.0
    %93 = vmatprep.subr.mxu0 0.0
    %94 = vmatpush1.xpose.msra.mxu0 0.0
    %95 = vmatprep.subr.mxu0 0.0
    %96 = vmatpush1.xpose.msra.mxu0 0.0
    %97 = vmatprep.subr.mxu0 0.0
    %98 = vmatpush1.xpose.msra.mxu0 0.0
    %99 = vmatprep.subr.mxu0 0.0
    %100 = vmatpush1.xpose.msra.mxu0 0.0
    %101 = vmatprep.subr.mxu0 0.0
    %102 = vmatpush1.xpose.msra.mxu0 0.0
    %103 = vmatprep.subr.mxu0 0.0
    %104 = vmatpush1.xpose.msra.mxu0 0.0
    %105 = vmatprep.subr.mxu0 0.0
    %106 = vmatpush1.xpose.msra.mxu0 0.0
    %107 = vmatprep.mubr.f32.mxu0 0.0
    %108 = vmatmul.mubr.f32.gmra.mrb[0].mxu0 %v29
    %v109 = vpop.f32.mrb[0].mxu0
    %v110 = vadd.f32 %v25, %v109
    %v111 = vpop.f32.mrb[0].mxu0
    %112 = vdwg.mxu0
    %vm113 = vcmask 261120
    %114 = vst.msk [vmem:[#allocation2] sm:$0xff] %vm113, %v110
    // Predicated region
    $region14: #{encoder1_forward.1} parent=1 // pred_check
      _
    $region15: #{encoder1_forward.1} parent=1 // pred_check_branch
      %116 = sbr.rel (0) target = $region17
    $region16: #{encoder1_forward.1} parent=1 // pred_region
      %s118 = ssub.s32 128, 128
      %119 = vsyncadd [#allocation3], %s118
      %s121 = sshll.u32 [#allocation2], 4
      %s122 = int_to_ptr.vmem [resolvable:$true] %s121
      %124 = dma.vmem_to_hbm [thread:$0]  %s122, 128, %s3, [#allocation3]
    $region17: #{encoder1_forward.1} parent=1 // pred_fallthru
      _
    // Predicated region
    $region18: #{encoder1_forward.1} parent=1 // pred_check
      _
    $region19: #{encoder1_forward.1} parent=1 // pred_check_branch
      %126 = sbr.rel (0) target = $region21
    $region20: #{encoder1_forward.1} parent=1 // pred_region
      %127 = dma.done [#allocation3], 128
    $region21: #{encoder1_forward.1} parent=1 // pred_fallthru
      _
    %128 = vsyncpa [#allocation3], 1

</llo_original>
